<compile_context>
chip_gen: v7x
topology: tpu7x:2x2x1
jax: 0.10.0
libtpu: 0.0.40
codegen_flags: <defaults>
</compile_context>

<pallas_src>
import functools

import jax
import jax.numpy as jnp
from jax.experimental import pallas as pl
from jax.experimental.pallas import tpu as pltpu

LANES = 128  # lane width of every packed parameter block / intermediate


def gcn_kernel(x_ref, a_ref, p_ref, o_ref, *, xs, r1, r2):
    """Fused 2-layer GCN + linear classifier.  All operands fully resident in VMEM.

    Packed-parameter slab layout (all row offsets are multiples of 8):
      rows [0, xs)            : W1            (xs, H1) zero-padded to 128 lanes
      row  xs                 : b1            (1, 128)
      rows [r1, r1+128)       : W2            (H1, H2) zero-padded to (128, 128)
      row  r1+128             : b2            (1, 128)
      rows [r2, r2+128)       : fc1_w^T       (H2, C)  zero-padded to (128, 128)
      row  r2+128             : fc1_b         (1, 128)
    Zero-padded columns stay exactly zero through every matmul / bias / ReLU, so
    the padded math is bit-equivalent to the unpadded math in the first C lanes.
    """
    x = x_ref[...]
    a = a_ref[...]

    w1 = p_ref[0:xs, :]
    b1 = p_ref[xs:xs + 1, :]
    w2 = p_ref[r1:r1 + LANES, :]
    b2 = p_ref[r1 + LANES:r1 + LANES + 1, :]
    fw = p_ref[r2:r2 + LANES, :]
    fb = p_ref[r2 + LANES:r2 + LANES + 1, :]

    # Layer 1: relu(A_hat @ (X @ W1 + b1))
    h = jnp.dot(x, w1, preferred_element_type=jnp.float32) + b1
    h = jnp.maximum(jnp.dot(a, h, preferred_element_type=jnp.float32), 0.0)

    # Layer 2: relu(A_hat @ (H1 @ W2 + b2))
    h = jnp.dot(h, w2, preferred_element_type=jnp.float32) + b2
    h = jnp.maximum(jnp.dot(a, h, preferred_element_type=jnp.float32), 0.0)

    # Classifier: H2 @ fc1_W^T + fc1_b   (lane-dense (N, 128) store; cols >= C are 0)
    o_ref[...] = jnp.dot(h, fw, preferred_element_type=jnp.float32) + fb


def pack_gcn_params(W1, b1, W2, b2, fc1_w, fc1_b):
    """One-time parameter packing (load time, NOT per forward call).

    Packs every weight/bias into one (rows, 128) f32 slab so the kernel takes a
    single parameter input (one DMA).  Blocks are zero-padded to 128 lanes and
    start at multiple-of-8 rows so in-kernel static slices are sublane-aligned.
    Returns (params, xs, r1, r2, num_classes).
    """
    X_size, H1 = W1.shape
    H1b, H2 = W2.shape
    C, H2b = fc1_w.shape
    assert H1b == H1 and H2b == H2
    assert H1 <= LANES and H2 <= LANES and C <= LANES, "hidden/class dims must fit 128 lanes"
    if X_size % 8 != 0:
        # Perf-only hazard: the b1 row slice would not be sublane-aligned.
        pass  # still correct; alignment padding below keeps the other blocks aligned

    def rup(n, m=8):
        return (n + m - 1) // m * m

    r1 = rup(X_size + 1)          # start of the W2 block
    r2 = rup(r1 + LANES + 1)      # start of the fc block
    total = rup(r2 + LANES + 1)

    p = jnp.zeros((total, LANES), jnp.float32)
    p = p.at[0:X_size, 0:H1].set(W1.astype(jnp.float32))
    p = p.at[X_size, 0:H1].set(b1.astype(jnp.float32))
    p = p.at[r1:r1 + H1, 0:H2].set(W2.astype(jnp.float32))
    p = p.at[r1 + LANES, 0:H2].set(b2.astype(jnp.float32))
    p = p.at[r2:r2 + H2, 0:C].set(fc1_w.T.astype(jnp.float32))
    p = p.at[r2 + LANES, 0:C].set(fc1_b.astype(jnp.float32))
    return p, X_size, r1, r2, C


@functools.partial(jax.jit, static_argnames=("xs", "r1", "r2", "num_classes"))
def gcn_forward(X, A_hat, params, *, xs, r1, r2, num_classes):
    """Per-call path: one pallas_call (3 input DMAs) + a thin output slice."""
    N = X.shape[0]
    rows = params.shape[0]

    # Advisory cost hint for the XLA scheduler (latency-bound at this size).
    flops = 2 * N * (xs * LANES + N * LANES + LANES * LANES + N * LANES + LANES * LANES)
    bytes_accessed = 4 * (N * xs + N * N + rows * LANES + N * LANES)
    cost = pl.CostEstimate(flops=flops, transcendentals=0, bytes_accessed=bytes_accessed)

    vmem = pl.BlockSpec(memory_space=pltpu.MemorySpace.VMEM)
    out_padded = pl.pallas_call(
        functools.partial(gcn_kernel, xs=xs, r1=r1, r2=r2),
        out_shape=jax.ShapeDtypeStruct((N, LANES), jnp.float32),
        in_specs=[vmem, vmem, vmem],
        out_specs=vmem,
        cost_estimate=cost,
    )(X, A_hat, params)
    return out_padded[:, :num_classes]


if __name__ == "__main__":
    # Small synthetic shapes consistent with the module's __init__/forward.
    N = 8                 # number of graph nodes
    X_size = 32           # input feature dim
    H1 = 32               # args.hidden_size_1
    H2 = 16               # args.hidden_size_2
    C = 4                 # args.num_classes

    key = jax.random.PRNGKey(0)
    kX, kA, kW1, kb1, kW2, kb2, kfw, kfb = jax.random.split(key, 8)

    X = jax.random.normal(kX, (N, X_size), dtype=jnp.float32)

    # Row-normalized dense adjacency (stand-in for the precomputed A_hat).
    A_raw = jnp.abs(jax.random.normal(kA, (N, N), dtype=jnp.float32))
    A_hat = A_raw / jnp.sum(A_raw, axis=1, keepdims=True)

    # Parameter init mirroring the module (normal with std = 2/(fan_in+fan_out)).
    var1 = 2.0 / (H1 + X_size)
    var2 = 2.0 / (H2 + H1)
    W1 = jax.random.normal(kW1, (X_size, H1), dtype=jnp.float32) * var1
    b1 = jax.random.normal(kb1, (H1,), dtype=jnp.float32) * var1
    W2 = jax.random.normal(kW2, (H1, H2), dtype=jnp.float32) * var2
    b2 = jax.random.normal(kb2, (H2,), dtype=jnp.float32) * var2
    # nn.Linear(H2, C): weight (C, H2), bias (C,)
    bound = 1.0 / jnp.sqrt(jnp.float32(H2))
    fc1_w = jax.random.uniform(kfw, (C, H2), dtype=jnp.float32, minval=-bound, maxval=bound)
    fc1_b = jax.random.uniform(kfb, (C,), dtype=jnp.float32, minval=-bound, maxval=bound)

    # One-time packing (parameter-load time), then the lean per-call forward.
    params, xs, r1, r2, num_classes = pack_gcn_params(W1, b1, W2, b2, fc1_w, fc1_b)
    params = jax.block_until_ready(params)

    out = gcn_forward(X, A_hat, params, xs=xs, r1=r1, r2=r2, num_classes=num_classes)
    out = jax.block_until_ready(out)

    # Reference check in plain JAX (same math as the PyTorch module).
    h = jnp.maximum(A_hat @ (X @ W1 + b1), 0.0)
    h = jnp.maximum(A_hat @ (h @ W2 + b2), 0.0)
    ref = h @ fc1_w.T + fc1_b
    assert out.shape == (N, C)
    assert jnp.allclose(out, ref, atol=1e-5, rtol=1e-5), "mismatch vs reference"

    print("KERNEL_OK")
</pallas_src>

<mosaic_0001>
module attributes {stable_mosaic.version = 11 : i64} {
  func.func @gcn_kernel(%arg0: memref<8x32xf32, #tpu.memory_space<vmem>>, %arg1: memref<8x8xf32, #tpu.memory_space<vmem>>, %arg2: memref<312x128xf32, #tpu.memory_space<vmem>>, %arg3: memref<8x128xf32, #tpu.memory_space<vmem>>) attributes {dimension_semantics = [], scalar_prefetch = 0 : i64, scratch_operands = 0 : i64, tpu.core_type = #tpu.core_type<tc>} {
    %c0 = arith.constant 0 : index
    %c0_0 = arith.constant 0 : index
    %0 = vector.load %arg0[%c0, %c0_0] : memref<8x32xf32, #tpu.memory_space<vmem>>, vector<8x32xf32>
    %c0_1 = arith.constant 0 : index
    %c0_2 = arith.constant 0 : index
    %1 = vector.load %arg1[%c0_1, %c0_2] : memref<8x8xf32, #tpu.memory_space<vmem>>, vector<8x8xf32>
    %c0_3 = arith.constant 0 : index
    %c0_4 = arith.constant 0 : index
    %2 = vector.load %arg2[%c0_3, %c0_4] : memref<312x128xf32, #tpu.memory_space<vmem>>, vector<32x128xf32>
    %c32 = arith.constant 32 : index
    %c0_5 = arith.constant 0 : index
    %3 = vector.load %arg2[%c32, %c0_5] : memref<312x128xf32, #tpu.memory_space<vmem>>, vector<1x128xf32>
    %c40 = arith.constant 40 : index
    %c0_6 = arith.constant 0 : index
    %4 = vector.load %arg2[%c40, %c0_6] : memref<312x128xf32, #tpu.memory_space<vmem>>, vector<128x128xf32>
    %c168 = arith.constant 168 : index
    %c0_7 = arith.constant 0 : index
    %5 = vector.load %arg2[%c168, %c0_7] : memref<312x128xf32, #tpu.memory_space<vmem>>, vector<1x128xf32>
    %c176 = arith.constant 176 : index
    %c0_8 = arith.constant 0 : index
    %6 = vector.load %arg2[%c176, %c0_8] : memref<312x128xf32, #tpu.memory_space<vmem>>, vector<128x128xf32>
    %c304 = arith.constant 304 : index
    %c0_9 = arith.constant 0 : index
    %7 = vector.load %arg2[%c304, %c0_9] : memref<312x128xf32, #tpu.memory_space<vmem>>, vector<1x128xf32>
    %cst = arith.constant dense<0.000000e+00> : vector<8x128xf32>
    %8 = tpu.matmul %0, %2, %cst {dimension_numbers = #tpu.dot_dimension_numbers<[1], [0], [0], [1], [0, 0, 1, 1], [], []>} : vector<8x32xf32>, vector<32x128xf32>, vector<8x128xf32> -> vector<8x128xf32>
    %9 = vector.broadcast %3 : vector<1x128xf32> to vector<8x128xf32>
    %10 = arith.addf %8, %9 : vector<8x128xf32>
    %cst_10 = arith.constant dense<0.000000e+00> : vector<8x128xf32>
    %11 = tpu.matmul %1, %10, %cst_10 {dimension_numbers = #tpu.dot_dimension_numbers<[1], [0], [0], [1], [0, 0, 1, 1], [], []>} : vector<8x8xf32>, vector<8x128xf32>, vector<8x128xf32> -> vector<8x128xf32>
    %cst_11 = arith.constant 0.000000e+00 : f32
    %12 = vector.broadcast %cst_11 : f32 to vector<8x128xf32>
    %13 = arith.maximumf %11, %12 : vector<8x128xf32>
    %cst_12 = arith.constant dense<0.000000e+00> : vector<8x128xf32>
    %14 = tpu.matmul %13, %4, %cst_12 {dimension_numbers = #tpu.dot_dimension_numbers<[1], [0], [0], [1], [0, 0, 1, 1], [], []>} : vector<8x128xf32>, vector<128x128xf32>, vector<8x128xf32> -> vector<8x128xf32>
    %15 = vector.broadcast %5 : vector<1x128xf32> to vector<8x128xf32>
    %16 = arith.addf %14, %15 : vector<8x128xf32>
    %cst_13 = arith.constant dense<0.000000e+00> : vector<8x128xf32>
    %17 = tpu.matmul %1, %16, %cst_13 {dimension_numbers = #tpu.dot_dimension_numbers<[1], [0], [0], [1], [0, 0, 1, 1], [], []>} : vector<8x8xf32>, vector<8x128xf32>, vector<8x128xf32> -> vector<8x128xf32>
    %cst_14 = arith.constant 0.000000e+00 : f32
    %18 = vector.broadcast %cst_14 : f32 to vector<8x128xf32>
    %19 = arith.maximumf %17, %18 : vector<8x128xf32>
    %cst_15 = arith.constant dense<0.000000e+00> : vector<8x128xf32>
    %20 = tpu.matmul %19, %6, %cst_15 {dimension_numbers = #tpu.dot_dimension_numbers<[1], [0], [0], [1], [0, 0, 1, 1], [], []>} : vector<8x128xf32>, vector<128x128xf32>, vector<8x128xf32> -> vector<8x128xf32>
    %21 = vector.broadcast %7 : vector<1x128xf32> to vector<8x128xf32>
    %22 = arith.addf %20, %21 : vector<8x128xf32>
    %c0_16 = arith.constant 0 : index
    %c0_17 = arith.constant 0 : index
    %23 = vector.load %arg3[%c0_16, %c0_17] : memref<8x128xf32, #tpu.memory_space<vmem>>, vector<8x128xf32>
    tpu.vector_store %arg3[%c0_16, %c0_17], %22 {strides = array<i32>} : memref<8x128xf32, #tpu.memory_space<vmem>>, vector<8x128xf32>,
    return
  }
}

</mosaic_0001>

<llo_original>
// kernel: gcn_forward.1
$region0: #{gcn_forward.1}
  #allocation0 [shape = 'u32[]', space=smem, size = 0x4, offset = 0x4, fixed_abs, tag = 'smem constant byte address 0x4 - core index']
  #allocation1 [shape = 'u32[144,128]{1,0:T(1,128)}', space=vmem, size = 0x12000, scoped, tag = 'internal scratch']
  %s0 = inlined_call_operand.hbm [shape: f32[8,32], index: 0, kind: input, shape index: {}]
  %s1 = inlined_call_operand.hbm [shape: f32[8,8], index: 1, kind: input, shape index: {}]
  %s2 = inlined_call_operand.hbm [shape: f32[312,128], index: 2, kind: input, shape index: {}]
  %s3 = inlined_call_operand.vmem [shape: f32[8,128], index: 3, kind: output, shape index: {}]
  %s4 = sld [smem:[#allocation0]]
  $region34: #{gcn_forward.1} parent=0
    _
  %s6 = ssub.s32 1, %s4
  %s7 = scalar_select 0, %s6, %s4
  $region1: #{gcn_forward.1} parent=0
    #allocation2 [shape = 'u8[4096]{0}', space=vmem, size = 0x1000, scoped, tag = 'input window, operand 0, single buffered']
    #allocation3 [shape = 's32[1]{0}', space=sflag, size = 0x4, scoped, tag = 'scoped memory for gcn_forward.1']
    #allocation4 [shape = 'u8[4096]{0}', space=vmem, size = 0x1000, scoped, tag = 'input window, operand 1, single buffered']
    #allocation5 [shape = 's32[1]{0}', space=sflag, size = 0x4, scoped, tag = 'scoped memory for gcn_forward.1']
    #allocation6 [shape = 'u8[159744]{0}', space=vmem, size = 0x27000, scoped, tag = 'input window, operand 2, single buffered']
    %8 = vsyncpa [#allocation3], 0
    %9 = vsyncpa [#allocation5], 0
    // Predicated region
    $region2: #{gcn_forward.1} parent=1 // pred_check
      _
    $region3: #{gcn_forward.1} parent=1 // pred_check_branch
      %11 = sbr.rel (0) target = $region5
    $region4: #{gcn_forward.1} parent=1 // pred_region
      %s13 = ssub.s32 128, 128
      %14 = vsyncadd [#allocation3], %s13
      %s16 = sshll.u32 [#allocation2], 4
      %s17 = int_to_ptr.vmem [resolvable:$true] %s16
      %19 = dma.hbm_to_vmem [thread:$0]  %s0, 128, %s17, [#allocation3]
    $region5: #{gcn_forward.1} parent=1 // pred_fallthru
      _
    // Predicated region
    $region6: #{gcn_forward.1} parent=1 // pred_check
      _
    $region7: #{gcn_forward.1} parent=1 // pred_check_branch
      %21 = sbr.rel (0) target = $region9
    $region8: #{gcn_forward.1} parent=1 // pred_region
      %s23 = ssub.s32 128, 128
      %24 = vsyncadd [#allocation5], %s23
      %s26 = sshll.u32 [#allocation4], 4
      %s27 = int_to_ptr.vmem [resolvable:$true] %s26
      %29 = dma.hbm_to_vmem [thread:$0]  %s1, 128, %s27, [#allocation5]
    $region9: #{gcn_forward.1} parent=1 // pred_fallthru
      _
    // Predicated region
    $region10: #{gcn_forward.1} parent=1 // pred_check
      _
    $region11: #{gcn_forward.1} parent=1 // pred_check_branch
      %31 = sbr.rel (0) target = $region13
    $region12: #{gcn_forward.1} parent=1 // pred_region
      %s33 = ssub.s32 4992, 4992
      %34 = vsyncadd [#allocation5], %s33
      %s35 = sshll.u32 [#allocation6], 4
      %s36 = int_to_ptr.vmem [resolvable:$true] %s35
      %41 = dma.hbm_to_vmem [thread:$0]  %s2, 4992, %s36, [#allocation5], 128, 128, 8
    $region13: #{gcn_forward.1} parent=1 // pred_fallthru
      _
    // Predicated region
    $region14: #{gcn_forward.1} parent=1 // pred_check
      _
    $region15: #{gcn_forward.1} parent=1 // pred_check_branch
      %43 = sbr.rel (0) target = $region17
    $region16: #{gcn_forward.1} parent=1 // pred_region
      %44 = dma.done [#allocation3], 128
    $region17: #{gcn_forward.1} parent=1 // pred_fallthru
      _
    // Predicated region
    $region18: #{gcn_forward.1} parent=1 // pred_check
      _
    $region19: #{gcn_forward.1} parent=1 // pred_check_branch
      %46 = sbr.rel (0) target = $region21
    $region20: #{gcn_forward.1} parent=1 // pred_region
      %47 = dma.done [#allocation5], 128
    $region21: #{gcn_forward.1} parent=1 // pred_fallthru
      _
    // Predicated region
    $region22: #{gcn_forward.1} parent=1 // pred_check
      _
    $region23: #{gcn_forward.1} parent=1 // pred_check_branch
      %49 = sbr.rel (0) target = $region25
    $region24: #{gcn_forward.1} parent=1 // pred_region
      %50 = dma.done [#allocation5], 4992
    $region25: #{gcn_forward.1} parent=1 // pred_fallthru
      _
    %v51 = vld [vmem:[#allocation2] sm:$0xff]
    %v52 = vld [vmem:[#allocation4] sm:$0xff]
    %v53 = vld [vmem:[#allocation6] sm:$0xff]
    %v54 = vld [vmem:[#allocation6 + $0x8] sm:$0xff]
    %v55 = vld [vmem:[#allocation6 + $0x10] sm:$0xff]
    %v56 = vld [vmem:[#allocation6 + $0x18] sm:$0xff]
    %v57 = vld [vmem:[#allocation6 + $0x20] sm:$0x1]
    %v58 = vld [vmem:[#allocation6 + $0x28] sm:$0xff]
    %v59 = vld [vmem:[#allocation6 + $0x30] sm:$0xff]
    %v60 = vld [vmem:[#allocation6 + $0x38] sm:$0xff]
    %v61 = vld [vmem:[#allocation6 + $0x40] sm:$0xff]
    %v62 = vld [vmem:[#allocation6 + $0x48] sm:$0xff]
    %v63 = vld [vmem:[#allocation6 + $0x50] sm:$0xff]
    %v64 = vld [vmem:[#allocation6 + $0x58] sm:$0xff]
    %v65 = vld [vmem:[#allocation6 + $0x60] sm:$0xff]
    %v66 = vld [vmem:[#allocation6 + $0x68] sm:$0xff]
    %v67 = vld [vmem:[#allocation6 + $0x70] sm:$0xff]
    %v68 = vld [vmem:[#allocation6 + $0x78] sm:$0xff]
    %v69 = vld [vmem:[#allocation6 + $0x80] sm:$0xff]
    %v70 = vld [vmem:[#allocation6 + $0x88] sm:$0xff]
    %v71 = vld [vmem:[#allocation6 + $0x90] sm:$0xff]
    %v72 = vld [vmem:[#allocation6 + $0x98] sm:$0xff]
    %v73 = vld [vmem:[#allocation6 + $0xa0] sm:$0xff]
    %v74 = vld [vmem:[#allocation6 + $0xa8] sm:$0x1]
    %v75 = vld [vmem:[#allocation6 + $0xb0] sm:$0xff]
    %v76 = vld [vmem:[#allocation6 + $0xb8] sm:$0xff]
    %v77 = vld [vmem:[#allocation6 + $0xc0] sm:$0xff]
    %v78 = vld [vmem:[#allocation6 + $0xc8] sm:$0xff]
    %v79 = vld [vmem:[#allocation6 + $0xd0] sm:$0xff]
    %v80 = vld [vmem:[#allocation6 + $0xd8] sm:$0xff]
    %v81 = vld [vmem:[#allocation6 + $0xe0] sm:$0xff]
    %v82 = vld [vmem:[#allocation6 + $0xe8] sm:$0xff]
    %v83 = vld [vmem:[#allocation6 + $0xf0] sm:$0xff]
    %v84 = vld [vmem:[#allocation6 + $0xf8] sm:$0xff]
    %v85 = vld [vmem:[#allocation6 + $0x100] sm:$0xff]
    %v86 = vld [vmem:[#allocation6 + $0x108] sm:$0xff]
    %v87 = vld [vmem:[#allocation6 + $0x110] sm:$0xff]
    %v88 = vld [vmem:[#allocation6 + $0x118] sm:$0xff]
    %v89 = vld [vmem:[#allocation6 + $0x120] sm:$0xff]
    %v90 = vld [vmem:[#allocation6 + $0x128] sm:$0xff]
    %v91 = vld [vmem:[#allocation6 + $0x130] sm:$0x1]
    %v92 = vlaneseq
    %v93 = vshrl.u32 %v92, 7
    %v94 = vsub.s32 0, %v93
    %v95 = vrot.slane %v57, %v94
    %vm96 = vcmask 261120
    %v98 = vsel %vm96, %v51, 0
    %100 = vmatprep.subr.mxu0 0.0
    %101 = vmatpush1.msra.mxu0 %v53
    %102 = vmatprep.subr.mxu0 0.0
    %103 = vmatpush1.msra.mxu0 %v54
    %104 = vmatprep.subr.mxu0 0.0
    %105 = vmatpush1.msra.mxu0 %v55
    %106 = vmatprep.subr.mxu0 0.0
    %107 = vmatpush1.msra.mxu0 %v56
    %108 = vmatprep.subr.mxu0 0.0
    %109 = vmatpush1.msra.mxu0 0.0
    %110 = vmatprep.subr.mxu0 0.0
    %111 = vmatpush1.msra.mxu0 0.0
    %112 = vmatprep.subr.mxu0 0.0
    %113 = vmatpush1.msra.mxu0 0.0
    %114 = vmatprep.subr.mxu0 0.0
    %115 = vmatpush1.msra.mxu0 0.0
    %116 = vmatprep.subr.mxu0 0.0
    %117 = vmatpush1.msra.mxu0 0.0
    %118 = vmatprep.subr.mxu0 0.0
    %119 = vmatpush1.msra.mxu0 0.0
    %120 = vmatprep.subr.mxu0 0.0
    %121 = vmatpush1.msra.mxu0 0.0
    %122 = vmatprep.subr.mxu0 0.0
    %123 = vmatpush1.msra.mxu0 0.0
    %124 = vmatprep.subr.mxu0 0.0
    %125 = vmatpush1.msra.mxu0 0.0
    %126 = vmatprep.subr.mxu0 0.0
    %127 = vmatpush1.msra.mxu0 0.0
    %128 = vmatprep.subr.mxu0 0.0
    %129 = vmatpush1.msra.mxu0 0.0
    %130 = vmatprep.subr.mxu0 0.0
    %131 = vmatpush1.msra.mxu0 0.0
    %132 = vmatprep.subr.mxu0 0.0
    %133 = vmatpush1.msra.mxu0 0.0
    %134 = vmatprep.subr.mxu0 0.0
    %135 = vmatpush1.msra.mxu0 0.0
    %136 = vmatprep.subr.mxu0 0.0
    %137 = vmatpush1.msra.mxu0 0.0
    %138 = vmatprep.subr.mxu0 0.0
    %139 = vmatpush1.msra.mxu0 0.0
    %140 = vmatprep.subr.mxu0 0.0
    %141 = vmatpush1.msra.mxu0 0.0
    %142 = vmatprep.subr.mxu0 0.0
    %143 = vmatpush1.msra.mxu0 0.0
    %144 = vmatprep.subr.mxu0 0.0
    %145 = vmatpush1.msra.mxu0 0.0
    %146 = vmatprep.subr.mxu0 0.0
    %147 = vmatpush1.msra.mxu0 0.0
    %148 = vmatprep.subr.mxu0 0.0
    %149 = vmatpush1.msra.mxu0 0.0
    %150 = vmatprep.subr.mxu0 0.0
    %151 = vmatpush1.msra.mxu0 0.0
    %152 = vmatprep.subr.mxu0 0.0
    %153 = vmatpush1.msra.mxu0 0.0
    %154 = vmatprep.subr.mxu0 0.0
    %155 = vmatpush1.msra.mxu0 0.0
    %156 = vmatprep.subr.mxu0 0.0
    %157 = vmatpush1.msra.mxu0 0.0
    %158 = vmatprep.subr.mxu0 0.0
    %159 = vmatpush1.msra.mxu0 0.0
    %160 = vmatprep.subr.mxu0 0.0
    %161 = vmatpush1.msra.mxu0 0.0
    %162 = vmatprep.subr.mxu0 0.0
    %163 = vmatpush1.msra.mxu0 0.0
    %164 = vmatprep.mubr.f32.mxu0 0.0
    %165 = vmatmul.mubr.f32.gmra.mrb[0].mxu0 %v98
    %v166 = vpop.f32.mrb[0].mxu0
    %v167 = vadd.f32 %v95, %v166
    %v168 = vpop.f32.mrb[0].mxu0
    %169 = vdwg.mxu0
    %vm170 = vcmask 64512
    %v172 = vsel %vm170, %v52, 0
    %174 = vmatprep.subr.mxu0 0.0
    %175 = vmatpush1.msra.mxu0 %v167
    %176 = vmatprep.subr.mxu0 0.0
    %177 = vmatpush1.msra.mxu0 0.0
    %178 = vmatprep.subr.mxu0 0.0
    %179 = vmatpush1.msra.mxu0 0.0
    %180 = vmatprep.subr.mxu0 0.0
    %181 = vmatpush1.msra.mxu0 0.0
    %182 = vmatprep.subr.mxu0 0.0
    %183 = vmatpush1.msra.mxu0 0.0
    %184 = vmatprep.subr.mxu0 0.0
    %185 = vmatpush1.msra.mxu0 0.0
    %186 = vmatprep.subr.mxu0 0.0
    %187 = vmatpush1.msra.mxu0 0.0
    %188 = vmatprep.subr.mxu0 0.0
    %189 = vmatpush1.msra.mxu0 0.0
    %190 = vmatprep.subr.mxu0 0.0
    %191 = vmatpush1.msra.mxu0 0.0
    %192 = vmatprep.subr.mxu0 0.0
    %193 = vmatpush1.msra.mxu0 0.0
    %194 = vmatprep.subr.mxu0 0.0
    %195 = vmatpush1.msra.mxu0 0.0
    %196 = vmatprep.subr.mxu0 0.0
    %197 = vmatpush1.msra.mxu0 0.0
    %198 = vmatprep.subr.mxu0 0.0
    %199 = vmatpush1.msra.mxu0 0.0
    %200 = vmatprep.subr.mxu0 0.0
    %201 = vmatpush1.msra.mxu0 0.0
    %202 = vmatprep.subr.mxu0 0.0
    %203 = vmatpush1.msra.mxu0 0.0
    %204 = vmatprep.subr.mxu0 0.0
    %205 = vmatpush1.msra.mxu0 0.0
    %206 = vmatprep.subr.mxu0 0.0
    %207 = vmatpush1.msra.mxu0 0.0
    %208 = vmatprep.subr.mxu0 0.0
    %209 = vmatpush1.msra.mxu0 0.0
    %210 = vmatprep.subr.mxu0 0.0
    %211 = vmatpush1.msra.mxu0 0.0
    %212 = vmatprep.subr.mxu0 0.0
    %213 = vmatpush1.msra.mxu0 0.0
    %214 = vmatprep.subr.mxu0 0.0
    %215 = vmatpush1.msra.mxu0 0.0
    %216 = vmatprep.subr.mxu0 0.0
    %217 = vmatpush1.msra.mxu0 0.0
    %218 = vmatprep.subr.mxu0 0.0
    %219 = vmatpush1.msra.mxu0 0.0
    %220 = vmatprep.subr.mxu0 0.0
    %221 = vmatpush1.msra.mxu0 0.0
    %222 = vmatprep.subr.mxu0 0.0
    %223 = vmatpush1.msra.mxu0 0.0
    %224 = vmatprep.subr.mxu0 0.0
    %225 = vmatpush1.msra.mxu0 0.0
    %226 = vmatprep.subr.mxu0 0.0
    %227 = vmatpush1.msra.mxu0 0.0
    %228 = vmatprep.subr.mxu0 0.0
    %229 = vmatpush1.msra.mxu0 0.0
    %230 = vmatprep.subr.mxu0 0.0
    %231 = vmatpush1.msra.mxu0 0.0
    %232 = vmatprep.subr.mxu0 0.0
    %233 = vmatpush1.msra.mxu0 0.0
    %234 = vmatprep.subr.mxu0 0.0
    %235 = vmatpush1.msra.mxu0 0.0
    %236 = vmatprep.subr.mxu0 0.0
    %237 = vmatpush1.msra.mxu0 0.0
    %238 = vmatprep.mubr.f32.mxu0 0.0
    %239 = vmatmul.mubr.f32.gmra.mrb[0].mxu0 %v172
    %v240 = vpop.f32.mrb[0].mxu0
    %v241 = vadd.f32 0.0, %v240
    %v242 = vpop.f32.mrb[0].mxu0
    %243 = vdwg.mxu0
    %v244 = vmax.f32 %v241, 0.0
    %v245 = vlaneseq
    %v246 = vshrl.u32 %v245, 7
    %v247 = vsub.s32 0, %v246
    %v248 = vrot.slane %v74, %v247
    %249 = vmatprep.subr.mxu0 0.0
    %250 = vmatpush1.msra.mxu0 %v58
    %251 = vmatprep.subr.mxu0 0.0
    %252 = vmatpush1.msra.mxu0 %v59
    %253 = vmatprep.subr.mxu0 0.0
    %254 = vmatpush1.msra.mxu0 %v60
    %255 = vmatprep.subr.mxu0 0.0
    %256 = vmatpush1.msra.mxu0 %v61
    %257 = vmatprep.subr.mxu0 0.0
    %258 = vmatpush1.msra.mxu0 %v62
    %259 = vmatprep.subr.mxu0 0.0
    %260 = vmatpush1.msra.mxu0 %v63
    %261 = vmatprep.subr.mxu0 0.0
    %262 = vmatpush1.msra.mxu0 %v64
    %263 = vmatprep.subr.mxu0 0.0
    %264 = vmatpush1.msra.mxu0 %v65
    %265 = vmatprep.subr.mxu0 0.0
    %266 = vmatpush1.msra.mxu0 %v66
    %267 = vmatprep.subr.mxu0 0.0
    %268 = vmatpush1.msra.mxu0 %v67
    %269 = vmatprep.subr.mxu0 0.0
    %270 = vmatpush1.msra.mxu0 %v68
    %271 = vmatprep.subr.mxu0 0.0
    %272 = vmatpush1.msra.mxu0 %v69
    %273 = vmatprep.subr.mxu0 0.0
    %274 = vmatpush1.msra.mxu0 %v70
    %275 = vmatprep.subr.mxu0 0.0
    %276 = vmatpush1.msra.mxu0 %v71
    %277 = vmatprep.subr.mxu0 0.0
    %278 = vmatpush1.msra.mxu0 %v72
    %279 = vmatprep.subr.mxu0 0.0
    %280 = vmatpush1.msra.mxu0 %v73
    %281 = vmatprep.subr.mxu0 0.0
    %282 = vmatpush1.msra.mxu0 0.0
    %283 = vmatprep.subr.mxu0 0.0
    %284 = vmatpush1.msra.mxu0 0.0
    %285 = vmatprep.subr.mxu0 0.0
    %286 = vmatpush1.msra.mxu0 0.0
    %287 = vmatprep.subr.mxu0 0.0
    %288 = vmatpush1.msra.mxu0 0.0
    %289 = vmatprep.subr.mxu0 0.0
    %290 = vmatpush1.msra.mxu0 0.0
    %291 = vmatprep.subr.mxu0 0.0
    %292 = vmatpush1.msra.mxu0 0.0
    %293 = vmatprep.subr.mxu0 0.0
    %294 = vmatpush1.msra.mxu0 0.0
    %295 = vmatprep.subr.mxu0 0.0
    %296 = vmatpush1.msra.mxu0 0.0
    %297 = vmatprep.subr.mxu0 0.0
    %298 = vmatpush1.msra.mxu0 0.0
    %299 = vmatprep.subr.mxu0 0.0
    %300 = vmatpush1.msra.mxu0 0.0
    %301 = vmatprep.subr.mxu0 0.0
    %302 = vmatpush1.msra.mxu0 0.0
    %303 = vmatprep.subr.mxu0 0.0
    %304 = vmatpush1.msra.mxu0 0.0
    %305 = vmatprep.subr.mxu0 0.0
    %306 = vmatpush1.msra.mxu0 0.0
    %307 = vmatprep.subr.mxu0 0.0
    %308 = vmatpush1.msra.mxu0 0.0
    %309 = vmatprep.subr.mxu0 0.0
    %310 = vmatpush1.msra.mxu0 0.0
    %311 = vmatprep.subr.mxu0 0.0
    %312 = vmatpush1.msra.mxu0 0.0
    %313 = vmatprep.mubr.f32.mxu0 0.0
    %314 = vmatmul.mubr.f32.gmra.mrb[0].mxu0 %v244
    %v315 = vpop.f32.mrb[0].mxu0
    %v316 = vadd.f32 %v248, %v315
    %v317 = vpop.f32.mrb[0].mxu0
    %318 = vdwg.mxu0
    %319 = vmatprep.subr.mxu0 0.0
    %320 = vmatpush1.msra.mxu0 %v316
    %321 = vmatprep.subr.mxu0 0.0
    %322 = vmatpush1.msra.mxu0 0.0
    %323 = vmatprep.subr.mxu0 0.0
    %324 = vmatpush1.msra.mxu0 0.0
    %325 = vmatprep.subr.mxu0 0.0
    %326 = vmatpush1.msra.mxu0 0.0
    %327 = vmatprep.subr.mxu0 0.0
    %328 = vmatpush1.msra.mxu0 0.0
    %329 = vmatprep.subr.mxu0 0.0
    %330 = vmatpush1.msra.mxu0 0.0
    %331 = vmatprep.subr.mxu0 0.0
    %332 = vmatpush1.msra.mxu0 0.0
    %333 = vmatprep.subr.mxu0 0.0
    %334 = vmatpush1.msra.mxu0 0.0
    %335 = vmatprep.subr.mxu0 0.0
    %336 = vmatpush1.msra.mxu0 0.0
    %337 = vmatprep.subr.mxu0 0.0
    %338 = vmatpush1.msra.mxu0 0.0
    %339 = vmatprep.subr.mxu0 0.0
    %340 = vmatpush1.msra.mxu0 0.0
    %341 = vmatprep.subr.mxu0 0.0
    %342 = vmatpush1.msra.mxu0 0.0
    %343 = vmatprep.subr.mxu0 0.0
    %344 = vmatpush1.msra.mxu0 0.0
    %345 = vmatprep.subr.mxu0 0.0
    %346 = vmatpush1.msra.mxu0 0.0
    %347 = vmatprep.subr.mxu0 0.0
    %348 = vmatpush1.msra.mxu0 0.0
    %349 = vmatprep.subr.mxu0 0.0
    %350 = vmatpush1.msra.mxu0 0.0
    %351 = vmatprep.subr.mxu0 0.0
    %352 = vmatpush1.msra.mxu0 0.0
    %353 = vmatprep.subr.mxu0 0.0
    %354 = vmatpush1.msra.mxu0 0.0
    %355 = vmatprep.subr.mxu0 0.0
    %356 = vmatpush1.msra.mxu0 0.0
    %357 = vmatprep.subr.mxu0 0.0
    %358 = vmatpush1.msra.mxu0 0.0
    %359 = vmatprep.subr.mxu0 0.0
    %360 = vmatpush1.msra.mxu0 0.0
    %361 = vmatprep.subr.mxu0 0.0
    %362 = vmatpush1.msra.mxu0 0.0
    %363 = vmatprep.subr.mxu0 0.0
    %364 = vmatpush1.msra.mxu0 0.0
    %365 = vmatprep.subr.mxu0 0.0
    %366 = vmatpush1.msra.mxu0 0.0
    %367 = vmatprep.subr.mxu0 0.0
    %368 = vmatpush1.msra.mxu0 0.0
    %369 = vmatprep.subr.mxu0 0.0
    %370 = vmatpush1.msra.mxu0 0.0
    %371 = vmatprep.subr.mxu0 0.0
    %372 = vmatpush1.msra.mxu0 0.0
    %373 = vmatprep.subr.mxu0 0.0
    %374 = vmatpush1.msra.mxu0 0.0
    %375 = vmatprep.subr.mxu0 0.0
    %376 = vmatpush1.msra.mxu0 0.0
    %377 = vmatprep.subr.mxu0 0.0
    %378 = vmatpush1.msra.mxu0 0.0
    %379 = vmatprep.subr.mxu0 0.0
    %380 = vmatpush1.msra.mxu0 0.0
    %381 = vmatprep.subr.mxu0 0.0
    %382 = vmatpush1.msra.mxu0 0.0
    %383 = vmatprep.mubr.f32.mxu0 0.0
    %384 = vmatmul.mubr.f32.gmra.mrb[0].mxu0 %v172
    %v385 = vpop.f32.mrb[0].mxu0
    %v386 = vadd.f32 0.0, %v385
    %v387 = vpop.f32.mrb[0].mxu0
    %388 = vdwg.mxu0
    %v389 = vmax.f32 %v386, 0.0
    %v390 = vlaneseq
    %v391 = vshrl.u32 %v390, 7
    %v392 = vsub.s32 0, %v391
    %v393 = vrot.slane %v91, %v392
    %394 = vmatprep.subr.mxu0 0.0
    %395 = vmatpush1.msra.mxu0 %v75
    %396 = vmatprep.subr.mxu0 0.0
    %397 = vmatpush1.msra.mxu0 %v76
    %398 = vmatprep.subr.mxu0 0.0
    %399 = vmatpush1.msra.mxu0 %v77
    %400 = vmatprep.subr.mxu0 0.0
    %401 = vmatpush1.msra.mxu0 %v78
    %402 = vmatprep.subr.mxu0 0.0
    %403 = vmatpush1.msra.mxu0 %v79
    %404 = vmatprep.subr.mxu0 0.0
    %405 = vmatpush1.msra.mxu0 %v80
    %406 = vmatprep.subr.mxu0 0.0
    %407 = vmatpush1.msra.mxu0 %v81
    %408 = vmatprep.subr.mxu0 0.0
    %409 = vmatpush1.msra.mxu0 %v82
    %410 = vmatprep.subr.mxu0 0.0
    %411 = vmatpush1.msra.mxu0 %v83
    %412 = vmatprep.subr.mxu0 0.0
    %413 = vmatpush1.msra.mxu0 %v84
    %414 = vmatprep.subr.mxu0 0.0
    %415 = vmatpush1.msra.mxu0 %v85
    %416 = vmatprep.subr.mxu0 0.0
    %417 = vmatpush1.msra.mxu0 %v86
    %418 = vmatprep.subr.mxu0 0.0
    %419 = vmatpush1.msra.mxu0 %v87
    %420 = vmatprep.subr.mxu0 0.0
    %421 = vmatpush1.msra.mxu0 %v88
    %422 = vmatprep.subr.mxu0 0.0
    %423 = vmatpush1.msra.mxu0 %v89
    %424 = vmatprep.subr.mxu0 0.0
    %425 = vmatpush1.msra.mxu0 %v90
    %426 = vmatprep.subr.mxu0 0.0
    %427 = vmatpush1.msra.mxu0 0.0
    %428 = vmatprep.subr.mxu0 0.0
    %429 = vmatpush1.msra.mxu0 0.0
    %430 = vmatprep.subr.mxu0 0.0
    %431 = vmatpush1.msra.mxu0 0.0
    %432 = vmatprep.subr.mxu0 0.0
    %433 = vmatpush1.msra.mxu0 0.0
    %434 = vmatprep.subr.mxu0 0.0
    %435 = vmatpush1.msra.mxu0 0.0
    %436 = vmatprep.subr.mxu0 0.0
    %437 = vmatpush1.msra.mxu0 0.0
    %438 = vmatprep.subr.mxu0 0.0
    %439 = vmatpush1.msra.mxu0 0.0
    %440 = vmatprep.subr.mxu0 0.0
    %441 = vmatpush1.msra.mxu0 0.0
    %442 = vmatprep.subr.mxu0 0.0
    %443 = vmatpush1.msra.mxu0 0.0
    %444 = vmatprep.subr.mxu0 0.0
    %445 = vmatpush1.msra.mxu0 0.0
    %446 = vmatprep.subr.mxu0 0.0
    %447 = vmatpush1.msra.mxu0 0.0
    %448 = vmatprep.subr.mxu0 0.0
    %449 = vmatpush1.msra.mxu0 0.0
    %450 = vmatprep.subr.mxu0 0.0
    %451 = vmatpush1.msra.mxu0 0.0
    %452 = vmatprep.subr.mxu0 0.0
    %453 = vmatpush1.msra.mxu0 0.0
    %454 = vmatprep.subr.mxu0 0.0
    %455 = vmatpush1.msra.mxu0 0.0
    %456 = vmatprep.subr.mxu0 0.0
    %457 = vmatpush1.msra.mxu0 0.0
    %458 = vmatprep.mubr.f32.mxu0 0.0
    %459 = vmatmul.mubr.f32.gmra.mrb[0].mxu0 %v389
    %v460 = vpop.f32.mrb[0].mxu0
    %v461 = vadd.f32 %v393, %v460
    %v462 = vpop.f32.mrb[0].mxu0
    %463 = vdwg.mxu0
    %464 = vst [vmem:[%s3] sm:$0xff] %v461
    // Predicated region
    $region26: #{gcn_forward.1} parent=1 // pred_check
      _
    $region27: #{gcn_forward.1} parent=1 // pred_check_branch
      %466 = sbr.rel (0) target = $region29
    $region28: #{gcn_forward.1} parent=1 // pred_region
      _
    $region29: #{gcn_forward.1} parent=1 // pred_fallthru
      _
    // Predicated region
    $region30: #{gcn_forward.1} parent=1 // pred_check
      _
    $region31: #{gcn_forward.1} parent=1 // pred_check_branch
      %468 = sbr.rel (0) target = $region33
    $region32: #{gcn_forward.1} parent=1 // pred_region
      _
    $region33: #{gcn_forward.1} parent=1 // pred_fallthru
      _
    %469 = vsyncpa [#allocation3], 1
    %470 = vsyncpa [#allocation5], 1

</llo_original>
